<compile_context>
chip_gen: v6e
topology: v6e:2x2x1
jax: 0.10.0
libtpu: 0.0.40
codegen_flags: <defaults>
</compile_context>

<pallas_src>
import jax
import jax.numpy as jnp
from jax.experimental import pallas as pl
from jax.experimental.pallas import tpu as pltpu


def mlp_kernel(x_ref, w1_ref, b1_ref, w2_ref, b2_ref, w3_ref, b3_ref,
               w4_ref, b4_ref, o_ref):
    # Layer 1: Linear(input_dim, 24) -> Dropout(identity) -> Tanh
    # In-kernel f32->bf16 cast (cheap VPU op hidden under the DMA); f32 accumulate.
    x_bf16 = x_ref[...].astype(jnp.bfloat16)
    h = jnp.dot(x_bf16, w1_ref[...], preferred_element_type=jnp.float32)
    h = jnp.tanh(h + b1_ref[...])
    # Layer 2: Linear(24, 12) -> Dropout(identity) -> Tanh   (f32, <5% of FLOPs)
    h = jnp.tanh(jnp.dot(h, w2_ref[...],
                         preferred_element_type=jnp.float32) + b2_ref[...])
    # Layer 3: Linear(12, 7) -> Dropout(identity) -> Tanh
    h = jnp.tanh(jnp.dot(h, w3_ref[...],
                         preferred_element_type=jnp.float32) + b3_ref[...])
    # Layer 4: Linear(7, output_dim_padded_to_128) -> Dropout(identity)
    h = jnp.dot(h, w4_ref[...], preferred_element_type=jnp.float32) + b4_ref[...]
    # bf16 lane-dense (unmasked) writeback.
    o_ref[...] = h.astype(o_ref.dtype)


def _round_up(x, m):
    return ((x + m - 1) // m) * m


def basic_dr4pkx8_forward(x_nchw, params):
    """Forward pass of Basic_dr4pkX8 (eval mode)."""
    B = x_nchw.shape[0]
    # nn.Flatten() glue in plain JAX
    x2d = x_nchw.reshape(B, -1)
    d_in = x2d.shape[1]

    w1, b1, w2, b2, w3, b3, w4, b4 = params
    out_dim = w4.shape[1]

    # Lane-dense output path: pad the final layer to a multiple of 128 lanes
    # (unmasked vst instead of masked partial stores); sliced off below.
    n_pad = max(128, _round_up(out_dim, 128))
    w4p = jnp.zeros((w4.shape[0], n_pad), jnp.float32).at[:, :out_dim].set(w4)
    b4p = jnp.zeros((1, n_pad), jnp.float32).at[:, :out_dim].set(b4)

    # Only w1 (the K=1024 matmul operand) is cast to bf16 (tiny, constant);
    # x is passed in its producer dtype and cast inside the kernel.
    w1b = w1.astype(jnp.bfloat16)
    w2f, w3f, w4f = (w.astype(jnp.float32) for w in (w2, w3, w4p))
    b1f, b2f, b3f, b4f = (b.astype(jnp.float32) for b in (b1, b2, b3, b4p))

    # Batch tiling:
    #   * up to 1024 rows per tile (near the HBM roofline knee on v6e),
    #   * but keep at least 2 grid steps when B allows it so v7x's two
    #     TensorCores both get work (dimension_semantics="parallel"),
    #   * tile must be a multiple of 8 sublanes OR equal the full batch dim,
    #   * no jnp.pad: ragged tails are handled by Pallas (OOB output rows
    #     are masked; OOB input rows only affect their own masked rows).
    MAX_TILE = 1024
    tile_b = min(MAX_TILE, _round_up(pl.cdiv(B, 2), 8))
    if tile_b >= B:
        tile_b = B                     # single full-extent block (always legal)
    n_tiles = pl.cdiv(B, tile_b)

    def const_spec(a):
        nd = a.ndim
        return pl.BlockSpec(a.shape, lambda i: (0,) * nd)

    # Advisory cost estimate so XLA can overlap this small call with neighbors.
    flops = 2 * B * (d_in * 24 + 24 * 12 + 12 * 7 + 7 * out_dim)
    transcendentals = B * (24 + 12 + 7)
    bytes_accessed = int(
        x2d.size * x2d.dtype.itemsize          # x read once, producer dtype
        + w1b.size * 2
        + (w2f.size + w3f.size + w4f.size) * 4
        + (b1f.size + b2f.size + b3f.size + b4f.size) * 4
        + B * n_pad * 2)                       # bf16 writeback

    out = pl.pallas_call(
        mlp_kernel,
        out_shape=jax.ShapeDtypeStruct((B, n_pad), jnp.bfloat16),
        grid_spec=pltpu.PrefetchScalarGridSpec(
            num_scalar_prefetch=0,
            grid=(n_tiles,),
            in_specs=[
                pl.BlockSpec((tile_b, d_in), lambda i: (i, 0)),   # x: tiled on B
                const_spec(w1b), const_spec(b1f),                 # weights/biases
                const_spec(w2f), const_spec(b2f),                 # stay resident
                const_spec(w3f), const_spec(b3f),
                const_spec(w4f), const_spec(b4f),
            ],
            out_specs=pl.BlockSpec((tile_b, n_pad), lambda i: (i, 0)),
        ),
        compiler_params=pltpu.CompilerParams(
            dimension_semantics=("parallel",),        # megacore sharding on v7x
            vmem_limit_bytes=32 * 1024 * 1024),       # headroom for 1024-row tiles
        cost_estimate=pl.CostEstimate(
            flops=flops,
            transcendentals=transcendentals,
            bytes_accessed=bytes_accessed),
    )(x2d, w1b, b1f, w2f, b2f, w3f, b3f, w4f, b4f)

    # Slice the 10 real lanes off the 128-lane padded bf16 slab; return f32 logits.
    return out[:, :out_dim].astype(jnp.float32)


def init_params(key, input_dim, output_dim):
    """Deterministic init mimicking nn.Linear default (uniform +/- 1/sqrt(fan_in))."""
    dims = [(input_dim, 24), (24, 12), (12, 7), (7, output_dim)]
    params = []
    for i, (fan_in, fan_out) in enumerate(dims):
        kw, kb = jax.random.split(jax.random.fold_in(key, i))
        bound = 1.0 / (fan_in ** 0.5)
        w = jax.random.uniform(kw, (fan_in, fan_out), jnp.float32, -bound, bound)
        b = jax.random.uniform(kb, (1, fan_out), jnp.float32, -bound, bound)
        params += [w, b]
    return tuple(params)


if __name__ == "__main__":
    key = jax.random.PRNGKey(0)
    k_x, k_p = jax.random.split(key)

    # Input consistent with the module: NCHW tensor that gets flattened.
    B, C, H, W = 8, 4, 16, 16
    input_dim = C * H * W          # 1024
    output_dim = 10

    x = jax.random.normal(k_x, (B, C, H, W), jnp.float32)
    params = init_params(k_p, input_dim, output_dim)

    out = basic_dr4pkx8_forward(x, params)
    out = jax.block_until_ready(out)

    # Sanity check against a pure-JAX f32 reference (eval-mode dropout = identity).
    # Tolerance covers the bf16 first-matmul operands and the bf16 writeback.
    x2d = x.reshape(B, -1)
    w1, b1, w2, b2, w3, b3, w4, b4 = params
    ref = jnp.tanh(x2d @ w1 + b1)
    ref = jnp.tanh(ref @ w2 + b2)
    ref = jnp.tanh(ref @ w3 + b3)
    ref = ref @ w4 + b4
    assert out.shape == (B, output_dim)
    assert jnp.allclose(out, ref, atol=2e-2, rtol=2e-2), (
        float(jnp.max(jnp.abs(out - ref))))

    print("KERNEL_OK")
</pallas_src>

<mosaic_0001>
module attributes {stable_mosaic.version = 11 : i64} {
  func.func @mlp_kernel(%arg0: i32, %arg1: memref<8x1024xf32, #tpu.memory_space<vmem>>, %arg2: memref<1024x24xbf16, #tpu.memory_space<vmem>>, %arg3: memref<1x24xf32, #tpu.memory_space<vmem>>, %arg4: memref<24x12xf32, #tpu.memory_space<vmem>>, %arg5: memref<1x12xf32, #tpu.memory_space<vmem>>, %arg6: memref<12x7xf32, #tpu.memory_space<vmem>>, %arg7: memref<1x7xf32, #tpu.memory_space<vmem>>, %arg8: memref<7x128xf32, #tpu.memory_space<vmem>>, %arg9: memref<1x128xf32, #tpu.memory_space<vmem>>, %arg10: memref<8x128xbf16, #tpu.memory_space<vmem>>) attributes {dimension_semantics = [#tpu.dimension_semantics<parallel>], iteration_bounds = array<i64: 1>, scalar_prefetch = 0 : i64, scratch_operands = 0 : i64, tpu.core_type = #tpu.core_type<tc>, window_params = [{transform_indices = @transform_0, window_bounds = array<i64: 8, 1024>}, {pipeline_mode = #tpu.pipeline_mode<synchronous>, transform_indices = @transform_1, window_bounds = array<i64: 1024, 24>}, {pipeline_mode = #tpu.pipeline_mode<synchronous>, transform_indices = @transform_2, window_bounds = array<i64: 1, 24>}, {pipeline_mode = #tpu.pipeline_mode<synchronous>, transform_indices = @transform_3, window_bounds = array<i64: 24, 12>}, {pipeline_mode = #tpu.pipeline_mode<synchronous>, transform_indices = @transform_4, window_bounds = array<i64: 1, 12>}, {pipeline_mode = #tpu.pipeline_mode<synchronous>, transform_indices = @transform_5, window_bounds = array<i64: 12, 7>}, {pipeline_mode = #tpu.pipeline_mode<synchronous>, transform_indices = @transform_6, window_bounds = array<i64: 1, 7>}, {pipeline_mode = #tpu.pipeline_mode<synchronous>, transform_indices = @transform_7, window_bounds = array<i64: 7, 128>}, {pipeline_mode = #tpu.pipeline_mode<synchronous>, transform_indices = @transform_8, window_bounds = array<i64: 1, 128>}, {transform_indices = @transform_9, window_bounds = array<i64: 8, 128>}]} {
    %c0 = arith.constant 0 : index
    %c0_0 = arith.constant 0 : index
    %0 = vector.load %arg1[%c0, %c0_0] : memref<8x1024xf32, #tpu.memory_space<vmem>>, vector<8x1024xf32>
    %1 = arith.truncf %0 : vector<8x1024xf32> to vector<8x1024xbf16>
    %c0_1 = arith.constant 0 : index
    %c0_2 = arith.constant 0 : index
    %2 = vector.load %arg2[%c0_1, %c0_2] : memref<1024x24xbf16, #tpu.memory_space<vmem>>, vector<1024x24xbf16>
    %cst = arith.constant dense<0.000000e+00> : vector<8x24xf32>
    %3 = tpu.matmul %1, %2, %cst {dimension_numbers = #tpu.dot_dimension_numbers<[1], [0], [0], [1], [0, 0, 1, 1], [], []>} : vector<8x1024xbf16>, vector<1024x24xbf16>, vector<8x24xf32> -> vector<8x24xf32>
    %c0_3 = arith.constant 0 : index
    %c0_4 = arith.constant 0 : index
    %4 = vector.load %arg3[%c0_3, %c0_4] : memref<1x24xf32, #tpu.memory_space<vmem>>, vector<1x24xf32>
    %5 = vector.broadcast %4 : vector<1x24xf32> to vector<8x24xf32>
    %6 = arith.addf %3, %5 : vector<8x24xf32>
    %7 = math.tanh %6 : vector<8x24xf32>
    %c0_5 = arith.constant 0 : index
    %c0_6 = arith.constant 0 : index
    %8 = vector.load %arg4[%c0_5, %c0_6] : memref<24x12xf32, #tpu.memory_space<vmem>>, vector<24x12xf32>
    %cst_7 = arith.constant dense<0.000000e+00> : vector<8x12xf32>
    %9 = tpu.matmul %7, %8, %cst_7 {dimension_numbers = #tpu.dot_dimension_numbers<[1], [0], [0], [1], [0, 0, 1, 1], [], []>} : vector<8x24xf32>, vector<24x12xf32>, vector<8x12xf32> -> vector<8x12xf32>
    %c0_8 = arith.constant 0 : index
    %c0_9 = arith.constant 0 : index
    %10 = vector.load %arg5[%c0_8, %c0_9] : memref<1x12xf32, #tpu.memory_space<vmem>>, vector<1x12xf32>
    %11 = vector.broadcast %10 : vector<1x12xf32> to vector<8x12xf32>
    %12 = arith.addf %9, %11 : vector<8x12xf32>
    %13 = math.tanh %12 : vector<8x12xf32>
    %c0_10 = arith.constant 0 : index
    %c0_11 = arith.constant 0 : index
    %14 = vector.load %arg6[%c0_10, %c0_11] : memref<12x7xf32, #tpu.memory_space<vmem>>, vector<12x7xf32>
    %cst_12 = arith.constant dense<0.000000e+00> : vector<8x7xf32>
    %15 = tpu.matmul %13, %14, %cst_12 {dimension_numbers = #tpu.dot_dimension_numbers<[1], [0], [0], [1], [0, 0, 1, 1], [], []>} : vector<8x12xf32>, vector<12x7xf32>, vector<8x7xf32> -> vector<8x7xf32>
    %c0_13 = arith.constant 0 : index
    %c0_14 = arith.constant 0 : index
    %16 = vector.load %arg7[%c0_13, %c0_14] : memref<1x7xf32, #tpu.memory_space<vmem>>, vector<1x7xf32>
    %17 = vector.broadcast %16 : vector<1x7xf32> to vector<8x7xf32>
    %18 = arith.addf %15, %17 : vector<8x7xf32>
    %19 = math.tanh %18 : vector<8x7xf32>
    %c0_15 = arith.constant 0 : index
    %c0_16 = arith.constant 0 : index
    %20 = vector.load %arg8[%c0_15, %c0_16] : memref<7x128xf32, #tpu.memory_space<vmem>>, vector<7x128xf32>
    %cst_17 = arith.constant dense<0.000000e+00> : vector<8x128xf32>
    %21 = tpu.matmul %19, %20, %cst_17 {dimension_numbers = #tpu.dot_dimension_numbers<[1], [0], [0], [1], [0, 0, 1, 1], [], []>} : vector<8x7xf32>, vector<7x128xf32>, vector<8x128xf32> -> vector<8x128xf32>
    %c0_18 = arith.constant 0 : index
    %c0_19 = arith.constant 0 : index
    %22 = vector.load %arg9[%c0_18, %c0_19] : memref<1x128xf32, #tpu.memory_space<vmem>>, vector<1x128xf32>
    %23 = vector.broadcast %22 : vector<1x128xf32> to vector<8x128xf32>
    %24 = arith.addf %21, %23 : vector<8x128xf32>
    %25 = arith.truncf %24 : vector<8x128xf32> to vector<8x128xbf16>
    %c0_20 = arith.constant 0 : index
    %c0_21 = arith.constant 0 : index
    %26 = vector.load %arg10[%c0_20, %c0_21] : memref<8x128xbf16, #tpu.memory_space<vmem>>, vector<8x128xbf16>
    tpu.vector_store %arg10[%c0_20, %c0_21], %25 {strides = array<i32>} : memref<8x128xbf16, #tpu.memory_space<vmem>>, vector<8x128xbf16>,
    return
  }
  func.func @transform_0(%arg0: i32) -> (i32, i32) {
    %c0_i32 = arith.constant 0 : i32
    %c0_i32_0 = arith.constant 0 : i32
    return %arg0, %c0_i32 : i32, i32
  }
  func.func @transform_1(%arg0: i32) -> (i32, i32) {
    %c0_i32 = arith.constant 0 : i32
    %c0_i32_0 = arith.constant 0 : i32
    %c0_i32_1 = arith.constant 0 : i32
    return %c0_i32, %c0_i32_0 : i32, i32
  }
  func.func @transform_2(%arg0: i32) -> (i32, i32) {
    %c0_i32 = arith.constant 0 : i32
    %c0_i32_0 = arith.constant 0 : i32
    %c0_i32_1 = arith.constant 0 : i32
    return %c0_i32, %c0_i32_0 : i32, i32
  }
  func.func @transform_3(%arg0: i32) -> (i32, i32) {
    %c0_i32 = arith.constant 0 : i32
    %c0_i32_0 = arith.constant 0 : i32
    %c0_i32_1 = arith.constant 0 : i32
    return %c0_i32, %c0_i32_0 : i32, i32
  }
  func.func @transform_4(%arg0: i32) -> (i32, i32) {
    %c0_i32 = arith.constant 0 : i32
    %c0_i32_0 = arith.constant 0 : i32
    %c0_i32_1 = arith.constant 0 : i32
    return %c0_i32, %c0_i32_0 : i32, i32
  }
  func.func @transform_5(%arg0: i32) -> (i32, i32) {
    %c0_i32 = arith.constant 0 : i32
    %c0_i32_0 = arith.constant 0 : i32
    %c0_i32_1 = arith.constant 0 : i32
    return %c0_i32, %c0_i32_0 : i32, i32
  }
  func.func @transform_6(%arg0: i32) -> (i32, i32) {
    %c0_i32 = arith.constant 0 : i32
    %c0_i32_0 = arith.constant 0 : i32
    %c0_i32_1 = arith.constant 0 : i32
    return %c0_i32, %c0_i32_0 : i32, i32
  }
  func.func @transform_7(%arg0: i32) -> (i32, i32) {
    %c0_i32 = arith.constant 0 : i32
    %c0_i32_0 = arith.constant 0 : i32
    %c0_i32_1 = arith.constant 0 : i32
    return %c0_i32, %c0_i32_0 : i32, i32
  }
  func.func @transform_8(%arg0: i32) -> (i32, i32) {
    %c0_i32 = arith.constant 0 : i32
    %c0_i32_0 = arith.constant 0 : i32
    %c0_i32_1 = arith.constant 0 : i32
    return %c0_i32, %c0_i32_0 : i32, i32
  }
  func.func @transform_9(%arg0: i32) -> (i32, i32) {
    %c0_i32 = arith.constant 0 : i32
    %c0_i32_0 = arith.constant 0 : i32
    return %arg0, %c0_i32 : i32, i32
  }
}

</mosaic_0001>

<llo_original>
// kernel: tpu_custom_call.1
$region0: #{tpu_custom_call.1}
  #allocation0 [shape = 'u32[]', space=smem, size = 0x4, offset = 0x4, fixed_abs, tag = 'smem constant byte address 0x4 - core index']
  #allocation1 [shape = 'u32[144,128]{1,0:T(1,128)}', space=vmem, size = 0x12000, scoped, tag = 'internal scratch']
  %s0 = inlined_call_operand.vmem [shape: f32[8,1024], index: 0, kind: input, shape index: {}]
  %s1 = inlined_call_operand.vmem [shape: bf16[1024,24], index: 1, kind: input, shape index: {}]
  %s2 = inlined_call_operand.vmem [shape: f32[1,24], index: 2, kind: input, shape index: {}]
  %s3 = inlined_call_operand.vmem [shape: f32[24,12], index: 3, kind: input, shape index: {}]
  %s4 = inlined_call_operand.vmem [shape: f32[1,12], index: 4, kind: input, shape index: {}]
  %s5 = inlined_call_operand.vmem [shape: f32[12,7], index: 5, kind: input, shape index: {}]
  %s6 = inlined_call_operand.vmem [shape: f32[1,7], index: 6, kind: input, shape index: {}]
  %s7 = inlined_call_operand.vmem [shape: f32[7,128], index: 7, kind: input, shape index: {}]
  %s8 = inlined_call_operand.vmem [shape: f32[1,128], index: 8, kind: input, shape index: {}]
  %s9 = inlined_call_operand.hbm [shape: bf16[8,128], index: 9, kind: output, shape index: {}]
  %s10 = sld [smem:[#allocation0]]
  $region46: #{tpu_custom_call.1} parent=0
    _
  %s12 = ssub.s32 1, %s10
  %s13 = scalar_select 0, %s12, %s10
  $region1: #{tpu_custom_call.1} parent=0
    #allocation2 [shape = 'u8[2048]{0}', space=vmem, size = 0x800, scoped, tag = 'output window, operand 0, single buffered']
    #allocation3 [shape = 's32[1]{0}', space=sflag, size = 0x4, scoped, tag = 'scoped memory for tpu_custom_call.1']
    %14 = vsyncpa [#allocation3], 0
    // Predicated region
    $region2: #{tpu_custom_call.1} parent=1 // pred_check
      _
    $region3: #{tpu_custom_call.1} parent=1 // pred_check_branch
      %16 = sbr.rel (0) target = $region5
    $region4: #{tpu_custom_call.1} parent=1 // pred_region
      _
    $region5: #{tpu_custom_call.1} parent=1 // pred_fallthru
      _
    // Predicated region
    $region6: #{tpu_custom_call.1} parent=1 // pred_check
      _
    $region7: #{tpu_custom_call.1} parent=1 // pred_check_branch
      %18 = sbr.rel (0) target = $region9
    $region8: #{tpu_custom_call.1} parent=1 // pred_region
      _
    $region9: #{tpu_custom_call.1} parent=1 // pred_fallthru
      _
    // Predicated region
    $region10: #{tpu_custom_call.1} parent=1 // pred_check
      _
    $region11: #{tpu_custom_call.1} parent=1 // pred_check_branch
      %20 = sbr.rel (0) target = $region13
    $region12: #{tpu_custom_call.1} parent=1 // pred_region
      _
    $region13: #{tpu_custom_call.1} parent=1 // pred_fallthru
      _
    // Predicated region
    $region14: #{tpu_custom_call.1} parent=1 // pred_check
      _
    $region15: #{tpu_custom_call.1} parent=1 // pred_check_branch
      %22 = sbr.rel (0) target = $region17
    $region16: #{tpu_custom_call.1} parent=1 // pred_region
      _
    $region17: #{tpu_custom_call.1} parent=1 // pred_fallthru
      _
    // Predicated region
    $region18: #{tpu_custom_call.1} parent=1 // pred_check
      _
    $region19: #{tpu_custom_call.1} parent=1 // pred_check_branch
      %24 = sbr.rel (0) target = $region21
    $region20: #{tpu_custom_call.1} parent=1 // pred_region
      _
    $region21: #{tpu_custom_call.1} parent=1 // pred_fallthru
      _
    // Predicated region
    $region22: #{tpu_custom_call.1} parent=1 // pred_check
      _
    $region23: #{tpu_custom_call.1} parent=1 // pred_check_branch
      %26 = sbr.rel (0) target = $region25
    $region24: #{tpu_custom_call.1} parent=1 // pred_region
      _
    $region25: #{tpu_custom_call.1} parent=1 // pred_fallthru
      _
    // Predicated region
    $region26: #{tpu_custom_call.1} parent=1 // pred_check
      _
    $region27: #{tpu_custom_call.1} parent=1 // pred_check_branch
      %28 = sbr.rel (0) target = $region29
    $region28: #{tpu_custom_call.1} parent=1 // pred_region
      _
    $region29: #{tpu_custom_call.1} parent=1 // pred_fallthru
      _
    // Predicated region
    $region30: #{tpu_custom_call.1} parent=1 // pred_check
      _
    $region31: #{tpu_custom_call.1} parent=1 // pred_check_branch
      %30 = sbr.rel (0) target = $region33
    $region32: #{tpu_custom_call.1} parent=1 // pred_region
      _
    $region33: #{tpu_custom_call.1} parent=1 // pred_fallthru
      _
    // Predicated region
    $region34: #{tpu_custom_call.1} parent=1 // pred_check
      _
    $region35: #{tpu_custom_call.1} parent=1 // pred_check_branch
      %32 = sbr.rel (0) target = $region37
    $region36: #{tpu_custom_call.1} parent=1 // pred_region
      _
    $region37: #{tpu_custom_call.1} parent=1 // pred_fallthru
      _
    %v34 = vld [vmem:[%s0] sm:$0xff]
    %v35 = vld [vmem:[%s0 + $0x8] sm:$0xff]
    %v36 = vld [vmem:[%s0 + $0x10] sm:$0xff]
    %v37 = vld [vmem:[%s0 + $0x18] sm:$0xff]
    %v38 = vld [vmem:[%s0 + $0x20] sm:$0xff]
    %v39 = vld [vmem:[%s0 + $0x28] sm:$0xff]
    %v40 = vld [vmem:[%s0 + $0x30] sm:$0xff]
    %v41 = vld [vmem:[%s0 + $0x38] sm:$0xff]
    %v42 = vpack.c.bf16 %v34, %v34
    %v43 = vpack.c.bf16 %v35, %v35
    %v44 = vpack.c.bf16 %v36, %v36
    %v45 = vpack.c.bf16 %v37, %v37
    %v46 = vpack.c.bf16 %v38, %v38
    %v47 = vpack.c.bf16 %v39, %v39
    %v48 = vpack.c.bf16 %v40, %v40
    %v49 = vpack.c.bf16 %v41, %v41
    %v50 = vld [vmem:[%s1] sm:$0xf]
    %v51 = vld [vmem:[%s1 + $0x4] sm:$0xf]
    %v52 = vld [vmem:[%s1 + $0x8] sm:$0xf]
    %v53 = vld [vmem:[%s1 + $0xc] sm:$0xf]
    %v54 = vld [vmem:[%s1 + $0x10] sm:$0xf]
    %v55 = vld [vmem:[%s1 + $0x14] sm:$0xf]
    %v56 = vld [vmem:[%s1 + $0x18] sm:$0xf]
    %v57 = vld [vmem:[%s1 + $0x1c] sm:$0xf]
    %v58 = vld [vmem:[%s1 + $0x20] sm:$0xf]
    %v59 = vld [vmem:[%s1 + $0x24] sm:$0xf]
    %v60 = vld [vmem:[%s1 + $0x28] sm:$0xf]
    %v61 = vld [vmem:[%s1 + $0x2c] sm:$0xf]
    %v62 = vld [vmem:[%s1 + $0x30] sm:$0xf]
    %v63 = vld [vmem:[%s1 + $0x34] sm:$0xf]
    %v64 = vld [vmem:[%s1 + $0x38] sm:$0xf]
    %v65 = vld [vmem:[%s1 + $0x3c] sm:$0xf]
    %v66 = vld [vmem:[%s1 + $0x40] sm:$0xf]
    %v67 = vld [vmem:[%s1 + $0x44] sm:$0xf]
    %v68 = vld [vmem:[%s1 + $0x48] sm:$0xf]
    %v69 = vld [vmem:[%s1 + $0x4c] sm:$0xf]
    %v70 = vld [vmem:[%s1 + $0x50] sm:$0xf]
    %v71 = vld [vmem:[%s1 + $0x54] sm:$0xf]
    %v72 = vld [vmem:[%s1 + $0x58] sm:$0xf]
    %v73 = vld [vmem:[%s1 + $0x5c] sm:$0xf]
    %v74 = vld [vmem:[%s1 + $0x60] sm:$0xf]
    %v75 = vld [vmem:[%s1 + $0x64] sm:$0xf]
    %v76 = vld [vmem:[%s1 + $0x68] sm:$0xf]
    %v77 = vld [vmem:[%s1 + $0x6c] sm:$0xf]
    %v78 = vld [vmem:[%s1 + $0x70] sm:$0xf]
    %v79 = vld [vmem:[%s1 + $0x74] sm:$0xf]
    %v80 = vld [vmem:[%s1 + $0x78] sm:$0xf]
    %v81 = vld [vmem:[%s1 + $0x7c] sm:$0xf]
    %v82 = vld [vmem:[%s1 + $0x80] sm:$0xf]
    %v83 = vld [vmem:[%s1 + $0x84] sm:$0xf]
    %v84 = vld [vmem:[%s1 + $0x88] sm:$0xf]
    %v85 = vld [vmem:[%s1 + $0x8c] sm:$0xf]
    %v86 = vld [vmem:[%s1 + $0x90] sm:$0xf]
    %v87 = vld [vmem:[%s1 + $0x94] sm:$0xf]
    %v88 = vld [vmem:[%s1 + $0x98] sm:$0xf]
    %v89 = vld [vmem:[%s1 + $0x9c] sm:$0xf]
    %v90 = vld [vmem:[%s1 + $0xa0] sm:$0xf]
    %v91 = vld [vmem:[%s1 + $0xa4] sm:$0xf]
    %v92 = vld [vmem:[%s1 + $0xa8] sm:$0xf]
    %v93 = vld [vmem:[%s1 + $0xac] sm:$0xf]
    %v94 = vld [vmem:[%s1 + $0xb0] sm:$0xf]
    %v95 = vld [vmem:[%s1 + $0xb4] sm:$0xf]
    %v96 = vld [vmem:[%s1 + $0xb8] sm:$0xf]
    %v97 = vld [vmem:[%s1 + $0xbc] sm:$0xf]
    %v98 = vld [vmem:[%s1 + $0xc0] sm:$0xf]
    %v99 = vld [vmem:[%s1 + $0xc4] sm:$0xf]
    %v100 = vld [vmem:[%s1 + $0xc8] sm:$0xf]
    %v101 = vld [vmem:[%s1 + $0xcc] sm:$0xf]
    %v102 = vld [vmem:[%s1 + $0xd0] sm:$0xf]
    %v103 = vld [vmem:[%s1 + $0xd4] sm:$0xf]
    %v104 = vld [vmem:[%s1 + $0xd8] sm:$0xf]
    %v105 = vld [vmem:[%s1 + $0xdc] sm:$0xf]
    %v106 = vld [vmem:[%s1 + $0xe0] sm:$0xf]
    %v107 = vld [vmem:[%s1 + $0xe4] sm:$0xf]
    %v108 = vld [vmem:[%s1 + $0xe8] sm:$0xf]
    %v109 = vld [vmem:[%s1 + $0xec] sm:$0xf]
    %v110 = vld [vmem:[%s1 + $0xf0] sm:$0xf]
    %v111 = vld [vmem:[%s1 + $0xf4] sm:$0xf]
    %v112 = vld [vmem:[%s1 + $0xf8] sm:$0xf]
    %v113 = vld [vmem:[%s1 + $0xfc] sm:$0xf]
    %v114 = vld [vmem:[%s1 + $0x100] sm:$0xf]
    %v115 = vld [vmem:[%s1 + $0x104] sm:$0xf]
    %v116 = vld [vmem:[%s1 + $0x108] sm:$0xf]
    %v117 = vld [vmem:[%s1 + $0x10c] sm:$0xf]
    %v118 = vld [vmem:[%s1 + $0x110] sm:$0xf]
    %v119 = vld [vmem:[%s1 + $0x114] sm:$0xf]
    %v120 = vld [vmem:[%s1 + $0x118] sm:$0xf]
    %v121 = vld [vmem:[%s1 + $0x11c] sm:$0xf]
    %v122 = vld [vmem:[%s1 + $0x120] sm:$0xf]
    %v123 = vld [vmem:[%s1 + $0x124] sm:$0xf]
    %v124 = vld [vmem:[%s1 + $0x128] sm:$0xf]
    %v125 = vld [vmem:[%s1 + $0x12c] sm:$0xf]
    %v126 = vld [vmem:[%s1 + $0x130] sm:$0xf]
    %v127 = vld [vmem:[%s1 + $0x134] sm:$0xf]
    %v128 = vld [vmem:[%s1 + $0x138] sm:$0xf]
    %v129 = vld [vmem:[%s1 + $0x13c] sm:$0xf]
    %v130 = vld [vmem:[%s1 + $0x140] sm:$0xf]
    %v131 = vld [vmem:[%s1 + $0x144] sm:$0xf]
    %v132 = vld [vmem:[%s1 + $0x148] sm:$0xf]
    %v133 = vld [vmem:[%s1 + $0x14c] sm:$0xf]
    %v134 = vld [vmem:[%s1 + $0x150] sm:$0xf]
    %v135 = vld [vmem:[%s1 + $0x154] sm:$0xf]
    %v136 = vld [vmem:[%s1 + $0x158] sm:$0xf]
    %v137 = vld [vmem:[%s1 + $0x15c] sm:$0xf]
    %v138 = vld [vmem:[%s1 + $0x160] sm:$0xf]
    %v139 = vld [vmem:[%s1 + $0x164] sm:$0xf]
    %v140 = vld [vmem:[%s1 + $0x168] sm:$0xf]
    %v141 = vld [vmem:[%s1 + $0x16c] sm:$0xf]
    %v142 = vld [vmem:[%s1 + $0x170] sm:$0xf]
    %v143 = vld [vmem:[%s1 + $0x174] sm:$0xf]
    %v144 = vld [vmem:[%s1 + $0x178] sm:$0xf]
    %v145 = vld [vmem:[%s1 + $0x17c] sm:$0xf]
    %v146 = vld [vmem:[%s1 + $0x180] sm:$0xf]
    %v147 = vld [vmem:[%s1 + $0x184] sm:$0xf]
    %v148 = vld [vmem:[%s1 + $0x188] sm:$0xf]
    %v149 = vld [vmem:[%s1 + $0x18c] sm:$0xf]
    %v150 = vld [vmem:[%s1 + $0x190] sm:$0xf]
    %v151 = vld [vmem:[%s1 + $0x194] sm:$0xf]
    %v152 = vld [vmem:[%s1 + $0x198] sm:$0xf]
    %v153 = vld [vmem:[%s1 + $0x19c] sm:$0xf]
    %v154 = vld [vmem:[%s1 + $0x1a0] sm:$0xf]
    %v155 = vld [vmem:[%s1 + $0x1a4] sm:$0xf]
    %v156 = vld [vmem:[%s1 + $0x1a8] sm:$0xf]
    %v157 = vld [vmem:[%s1 + $0x1ac] sm:$0xf]
    %v158 = vld [vmem:[%s1 + $0x1b0] sm:$0xf]
    %v159 = vld [vmem:[%s1 + $0x1b4] sm:$0xf]
    %v160 = vld [vmem:[%s1 + $0x1b8] sm:$0xf]
    %v161 = vld [vmem:[%s1 + $0x1bc] sm:$0xf]
    %v162 = vld [vmem:[%s1 + $0x1c0] sm:$0xf]
    %v163 = vld [vmem:[%s1 + $0x1c4] sm:$0xf]
    %v164 = vld [vmem:[%s1 + $0x1c8] sm:$0xf]
    %v165 = vld [vmem:[%s1 + $0x1cc] sm:$0xf]
    %v166 = vld [vmem:[%s1 + $0x1d0] sm:$0xf]
    %v167 = vld [vmem:[%s1 + $0x1d4] sm:$0xf]
    %v168 = vld [vmem:[%s1 + $0x1d8] sm:$0xf]
    %v169 = vld [vmem:[%s1 + $0x1dc] sm:$0xf]
    %v170 = vld [vmem:[%s1 + $0x1e0] sm:$0xf]
    %v171 = vld [vmem:[%s1 + $0x1e4] sm:$0xf]
    %v172 = vld [vmem:[%s1 + $0x1e8] sm:$0xf]
    %v173 = vld [vmem:[%s1 + $0x1ec] sm:$0xf]
    %v174 = vld [vmem:[%s1 + $0x1f0] sm:$0xf]
    %v175 = vld [vmem:[%s1 + $0x1f4] sm:$0xf]
    %v176 = vld [vmem:[%s1 + $0x1f8] sm:$0xf]
    %v177 = vld [vmem:[%s1 + $0x1fc] sm:$0xf]
    %v178 = vld [vmem:[%s2] sm:$0x1]
    %v180 = vlaneseq
    %v181 = vshrl.u32 %v180, 7
    %v182 = vsub.s32 0, %v181
    %v183 = vrot.slane %v178, %v182
    %v313 = vunpack.c.l.b16 %v50
    %v314 = vunpack.c.l.b16 %v51
    %v315 = vunpack.c.l.b16 %v52
    %v316 = vunpack.c.l.b16 %v53
    %v317 = vunpack.c.l.b16 %v54
    %v318 = vunpack.c.l.b16 %v55
    %v319 = vunpack.c.l.b16 %v56
    %v320 = vunpack.c.l.b16 %v57
    %v321 = vunpack.c.l.b16 %v58
    %v322 = vunpack.c.l.b16 %v59
    %v323 = vunpack.c.l.b16 %v60
    %v324 = vunpack.c.l.b16 %v61
    %v325 = vunpack.c.l.b16 %v62
    %v326 = vunpack.c.l.b16 %v63
    %v327 = vunpack.c.l.b16 %v64
    %v328 = vunpack.c.l.b16 %v65
    %v329 = vunpack.c.l.b16 %v66
    %v330 = vunpack.c.l.b16 %v67
    %v331 = vunpack.c.l.b16 %v68
    %v332 = vunpack.c.l.b16 %v69
    %v333 = vunpack.c.l.b16 %v70
    %v334 = vunpack.c.l.b16 %v71
    %v335 = vunpack.c.l.b16 %v72
    %v336 = vunpack.c.l.b16 %v73
    %v337 = vunpack.c.l.b16 %v74
    %v338 = vunpack.c.l.b16 %v75
    %v339 = vunpack.c.l.b16 %v76
    %v340 = vunpack.c.l.b16 %v77
    %v341 = vunpack.c.l.b16 %v78
    %v342 = vunpack.c.l.b16 %v79
    %v343 = vunpack.c.l.b16 %v80
    %v344 = vunpack.c.l.b16 %v81
    %v345 = vunpack.c.l.b16 %v82
    %v346 = vunpack.c.l.b16 %v83
    %v347 = vunpack.c.l.b16 %v84
    %v348 = vunpack.c.l.b16 %v85
    %v349 = vunpack.c.l.b16 %v86
    %v350 = vunpack.c.l.b16 %v87
    %v351 = vunpack.c.l.b16 %v88
    %v352 = vunpack.c.l.b16 %v89
    %v353 = vunpack.c.l.b16 %v90
    %v354 = vunpack.c.l.b16 %v91
    %v355 = vunpack.c.l.b16 %v92
    %v356 = vunpack.c.l.b16 %v93
    %v357 = vunpack.c.l.b16 %v94
    %v358 = vunpack.c.l.b16 %v95
    %v359 = vunpack.c.l.b16 %v96
    %v360 = vunpack.c.l.b16 %v97
    %v361 = vunpack.c.l.b16 %v98
    %v362 = vunpack.c.l.b16 %v99
    %v363 = vunpack.c.l.b16 %v100
    %v364 = vunpack.c.l.b16 %v101
    %v365 = vunpack.c.l.b16 %v102
    %v366 = vunpack.c.l.b16 %v103
    %v367 = vunpack.c.l.b16 %v104
    %v368 = vunpack.c.l.b16 %v105
    %v369 = vunpack.c.l.b16 %v106
    %v370 = vunpack.c.l.b16 %v107
    %v371 = vunpack.c.l.b16 %v108
    %v372 = vunpack.c.l.b16 %v109
    %v373 = vunpack.c.l.b16 %v110
    %v374 = vunpack.c.l.b16 %v111
    %v375 = vunpack.c.l.b16 %v112
    %v376 = vunpack.c.l.b16 %v113
    %v377 = vunpack.c.l.b16 %v114
    %v378 = vunpack.c.l.b16 %v115
    %v379 = vunpack.c.l.b16 %v116
    %v380 = vunpack.c.l.b16 %v117
    %v381 = vunpack.c.l.b16 %v118
    %v382 = vunpack.c.l.b16 %v119
    %v383 = vunpack.c.l.b16 %v120
    %v384 = vunpack.c.l.b16 %v121
    %v385 = vunpack.c.l.b16 %v122
    %v386 = vunpack.c.l.b16 %v123
    %v387 = vunpack.c.l.b16 %v124
    %v388 = vunpack.c.l.b16 %v125
    %v389 = vunpack.c.l.b16 %v126
    %v390 = vunpack.c.l.b16 %v127
    %v391 = vunpack.c.l.b16 %v128
    %v392 = vunpack.c.l.b16 %v129
    %v393 = vunpack.c.l.b16 %v130
    %v394 = vunpack.c.l.b16 %v131
    %v395 = vunpack.c.l.b16 %v132
    %v396 = vunpack.c.l.b16 %v133
    %v397 = vunpack.c.l.b16 %v134
    %v398 = vunpack.c.l.b16 %v135
    %v399 = vunpack.c.l.b16 %v136
    %v400 = vunpack.c.l.b16 %v137
    %v401 = vunpack.c.l.b16 %v138
    %v402 = vunpack.c.l.b16 %v139
    %v403 = vunpack.c.l.b16 %v140
    %v404 = vunpack.c.l.b16 %v141
    %v405 = vunpack.c.l.b16 %v142
    %v406 = vunpack.c.l.b16 %v143
    %v407 = vunpack.c.l.b16 %v144
    %v408 = vunpack.c.l.b16 %v145
    %v409 = vunpack.c.l.b16 %v146
    %v410 = vunpack.c.l.b16 %v147
    %v411 = vunpack.c.l.b16 %v148
    %v412 = vunpack.c.l.b16 %v149
    %v413 = vunpack.c.l.b16 %v150
    %v414 = vunpack.c.l.b16 %v151
    %v415 = vunpack.c.l.b16 %v152
    %v416 = vunpack.c.l.b16 %v153
    %v417 = vunpack.c.l.b16 %v154
    %v418 = vunpack.c.l.b16 %v155
    %v419 = vunpack.c.l.b16 %v156
    %v420 = vunpack.c.l.b16 %v157
    %v421 = vunpack.c.l.b16 %v158
    %v422 = vunpack.c.l.b16 %v159
    %v423 = vunpack.c.l.b16 %v160
    %v424 = vunpack.c.l.b16 %v161
    %v425 = vunpack.c.l.b16 %v162
    %v426 = vunpack.c.l.b16 %v163
    %v427 = vunpack.c.l.b16 %v164
    %v428 = vunpack.c.l.b16 %v165
    %v429 = vunpack.c.l.b16 %v166
    %v430 = vunpack.c.l.b16 %v167
    %v431 = vunpack.c.l.b16 %v168
    %v432 = vunpack.c.l.b16 %v169
    %v433 = vunpack.c.l.b16 %v170
    %v434 = vunpack.c.l.b16 %v171
    %v435 = vunpack.c.l.b16 %v172
    %v436 = vunpack.c.l.b16 %v173
    %v437 = vunpack.c.l.b16 %v174
    %v438 = vunpack.c.l.b16 %v175
    %v439 = vunpack.c.l.b16 %v176
    %v440 = vunpack.c.l.b16 %v177
    %v441 = vpack.c.b16 %v314, %v313
    %v442 = vpack.c.b16 %v316, %v315
    %v443 = vpack.c.b16 %v318, %v317
    %v444 = vpack.c.b16 %v320, %v319
    %v445 = vpack.c.b16 %v322, %v321
    %v446 = vpack.c.b16 %v324, %v323
    %v447 = vpack.c.b16 %v326, %v325
    %v448 = vpack.c.b16 %v328, %v327
    %v449 = vpack.c.b16 %v330, %v329
    %v450 = vpack.c.b16 %v332, %v331
    %v451 = vpack.c.b16 %v334, %v333
    %v452 = vpack.c.b16 %v336, %v335
    %v453 = vpack.c.b16 %v338, %v337
    %v454 = vpack.c.b16 %v340, %v339
    %v455 = vpack.c.b16 %v342, %v341
    %v456 = vpack.c.b16 %v344, %v343
    %v457 = vpack.c.b16 %v346, %v345
    %v458 = vpack.c.b16 %v348, %v347
    %v459 = vpack.c.b16 %v350, %v349
    %v460 = vpack.c.b16 %v352, %v351
    %v461 = vpack.c.b16 %v354, %v353
    %v462 = vpack.c.b16 %v356, %v355
    %v463 = vpack.c.b16 %v358, %v357
    %v464 = vpack.c.b16 %v360, %v359
    %v465 = vpack.c.b16 %v362, %v361
    %v466 = vpack.c.b16 %v364, %v363
    %v467 = vpack.c.b16 %v366, %v365
    %v468 = vpack.c.b16 %v368, %v367
    %v469 = vpack.c.b16 %v370, %v369
    %v470 = vpack.c.b16 %v372, %v371
    %v471 = vpack.c.b16 %v374, %v373
    %v472 = vpack.c.b16 %v376, %v375
    %v473 = vpack.c.b16 %v378, %v377
    %v474 = vpack.c.b16 %v380, %v379
    %v475 = vpack.c.b16 %v382, %v381
    %v476 = vpack.c.b16 %v384, %v383
    %v477 = vpack.c.b16 %v386, %v385
    %v478 = vpack.c.b16 %v388, %v387
    %v479 = vpack.c.b16 %v390, %v389
    %v480 = vpack.c.b16 %v392, %v391
    %v481 = vpack.c.b16 %v394, %v393
    %v482 = vpack.c.b16 %v396, %v395
    %v483 = vpack.c.b16 %v398, %v397
    %v484 = vpack.c.b16 %v400, %v399
    %v485 = vpack.c.b16 %v402, %v401
    %v486 = vpack.c.b16 %v404, %v403
    %v487 = vpack.c.b16 %v406, %v405
    %v488 = vpack.c.b16 %v408, %v407
    %v489 = vpack.c.b16 %v410, %v409
    %v490 = vpack.c.b16 %v412, %v411
    %v491 = vpack.c.b16 %v414, %v413
    %v492 = vpack.c.b16 %v416, %v415
    %v493 = vpack.c.b16 %v418, %v417
    %v494 = vpack.c.b16 %v420, %v419
    %v495 = vpack.c.b16 %v422, %v421
    %v496 = vpack.c.b16 %v424, %v423
    %v497 = vpack.c.b16 %v426, %v425
    %v498 = vpack.c.b16 %v428, %v427
    %v499 = vpack.c.b16 %v430, %v429
    %v500 = vpack.c.b16 %v432, %v431
    %v501 = vpack.c.b16 %v434, %v433
    %v502 = vpack.c.b16 %v436, %v435
    %v503 = vpack.c.b16 %v438, %v437
    %v504 = vpack.c.b16 %v440, %v439
    %569 = vmatprep.subr.bf16.mxu0 0
    %570 = vmatpush1.bf16.msra.mxu0 %v448
    %571 = vmatprep.subr.bf16.mxu0 0
    %572 = vmatpush1.bf16.msra.mxu0 %v447
    %573 = vmatprep.subr.bf16.mxu0 0
    %574 = vmatpush1.bf16.msra.mxu0 %v446
    %575 = vmatprep.subr.bf16.mxu0 0
    %576 = vmatpush1.bf16.msra.mxu0 %v445
    %577 = vmatprep.subr.bf16.mxu0 0
    %578 = vmatpush1.bf16.msra.mxu0 %v444
    %579 = vmatprep.subr.bf16.mxu0 0
    %580 = vmatpush1.bf16.msra.mxu0 %v443
    %581 = vmatprep.subr.bf16.mxu0 0
    %582 = vmatpush1.bf16.msra.mxu0 %v442
    %583 = vmatprep.subr.bf16.mxu0 0
    %584 = vmatpush1.bf16.msra.mxu0 %v441
    %585 = vmatprep.subr.bf16.mxu0 0
    %586 = vmatpush2.bf16.msra.mxu0 %v456
    %587 = vmatprep.subr.bf16.mxu0 0
    %588 = vmatpush2.bf16.msra.mxu0 %v455
    %589 = vmatprep.subr.bf16.mxu0 0
    %590 = vmatpush2.bf16.msra.mxu0 %v454
    %591 = vmatprep.subr.bf16.mxu0 0
    %592 = vmatpush2.bf16.msra.mxu0 %v453
    %593 = vmatprep.subr.bf16.mxu0 0
    %594 = vmatpush2.bf16.msra.mxu0 %v452
    %595 = vmatprep.subr.bf16.mxu0 0
    %596 = vmatpush2.bf16.msra.mxu0 %v451
    %597 = vmatprep.subr.bf16.mxu0 0
    %598 = vmatpush2.bf16.msra.mxu0 %v450
    %599 = vmatprep.subr.bf16.mxu0 0
    %600 = vmatpush2.bf16.msra.mxu0 %v449
    %601 = vmatprep.mubr.bf16.mxu0 %v43
    %602 = vmatmul.mubr.bf16.gmra.mxu0 %v42
    %v603 = vpop.f32.mrf.mxu0
    %v604 = vadd.f32 %v183, %v603
    %v605 = vpop.f32.mrf.mxu0
    %v606 = vpop.f32.mrf.mxu0
    %v607 = vpop.f32.mrf.mxu0
    %608 = vdwg.mxu0
    %609 = vmatprep.subr.bf16.mxu0 0
    %610 = vmatpush1.bf16.msra.mxu0 %v464
    %611 = vmatprep.subr.bf16.mxu0 0
    %612 = vmatpush1.bf16.msra.mxu0 %v463
    %613 = vmatprep.subr.bf16.mxu0 0
    %614 = vmatpush1.bf16.msra.mxu0 %v462
    %615 = vmatprep.subr.bf16.mxu0 0
    %616 = vmatpush1.bf16.msra.mxu0 %v461
    %617 = vmatprep.subr.bf16.mxu0 0
    %618 = vmatpush1.bf16.msra.mxu0 %v460
    %619 = vmatprep.subr.bf16.mxu0 0
    %620 = vmatpush1.bf16.msra.mxu0 %v459
    %621 = vmatprep.subr.bf16.mxu0 0
    %622 = vmatpush1.bf16.msra.mxu0 %v458
    %623 = vmatprep.subr.bf16.mxu0 0
    %624 = vmatpush1.bf16.msra.mxu0 %v457
    %625 = vmatprep.subr.bf16.mxu0 0
    %626 = vmatpush2.bf16.msra.mxu0 %v472
    %627 = vmatprep.subr.bf16.mxu0 0
    %628 = vmatpush2.bf16.msra.mxu0 %v471
    %629 = vmatprep.subr.bf16.mxu0 0
    %630 = vmatpush2.bf16.msra.mxu0 %v470
    %631 = vmatprep.subr.bf16.mxu0 0
    %632 = vmatpush2.bf16.msra.mxu0 %v469
    %633 = vmatprep.subr.bf16.mxu0 0
    %634 = vmatpush2.bf16.msra.mxu0 %v468
    %635 = vmatprep.subr.bf16.mxu0 0
    %636 = vmatpush2.bf16.msra.mxu0 %v467
    %637 = vmatprep.subr.bf16.mxu0 0
    %638 = vmatpush2.bf16.msra.mxu0 %v466
    %639 = vmatprep.subr.bf16.mxu0 0
    %640 = vmatpush2.bf16.msra.mxu0 %v465
    %641 = vmatprep.mubr.bf16.mxu0 %v45
    %642 = vmatmul.mubr.bf16.gmra.mxu0 %v44
    %v643 = vpop.f32.mrf.mxu0
    %v644 = vadd.f32 %v604, %v643
    %v645 = vpop.f32.mrf.mxu0
    %v646 = vpop.f32.mrf.mxu0
    %v647 = vpop.f32.mrf.mxu0
    %648 = vdwg.mxu0
    %649 = vmatprep.subr.bf16.mxu0 0
    %650 = vmatpush1.bf16.msra.mxu0 %v480
    %651 = vmatprep.subr.bf16.mxu0 0
    %652 = vmatpush1.bf16.msra.mxu0 %v479
    %653 = vmatprep.subr.bf16.mxu0 0
    %654 = vmatpush1.bf16.msra.mxu0 %v478
    %655 = vmatprep.subr.bf16.mxu0 0
    %656 = vmatpush1.bf16.msra.mxu0 %v477
    %657 = vmatprep.subr.bf16.mxu0 0
    %658 = vmatpush1.bf16.msra.mxu0 %v476
    %659 = vmatprep.subr.bf16.mxu0 0
    %660 = vmatpush1.bf16.msra.mxu0 %v475
    %661 = vmatprep.subr.bf16.mxu0 0
    %662 = vmatpush1.bf16.msra.mxu0 %v474
    %663 = vmatprep.subr.bf16.mxu0 0
    %664 = vmatpush1.bf16.msra.mxu0 %v473
    %665 = vmatprep.subr.bf16.mxu0 0
    %666 = vmatpush2.bf16.msra.mxu0 %v488
    %667 = vmatprep.subr.bf16.mxu0 0
    %668 = vmatpush2.bf16.msra.mxu0 %v487
    %669 = vmatprep.subr.bf16.mxu0 0
    %670 = vmatpush2.bf16.msra.mxu0 %v486
    %671 = vmatprep.subr.bf16.mxu0 0
    %672 = vmatpush2.bf16.msra.mxu0 %v485
    %673 = vmatprep.subr.bf16.mxu0 0
    %674 = vmatpush2.bf16.msra.mxu0 %v484
    %675 = vmatprep.subr.bf16.mxu0 0
    %676 = vmatpush2.bf16.msra.mxu0 %v483
    %677 = vmatprep.subr.bf16.mxu0 0
    %678 = vmatpush2.bf16.msra.mxu0 %v482
    %679 = vmatprep.subr.bf16.mxu0 0
    %680 = vmatpush2.bf16.msra.mxu0 %v481
    %681 = vmatprep.mubr.bf16.mxu0 %v47
    %682 = vmatmul.mubr.bf16.gmra.mxu0 %v46
    %v683 = vpop.f32.mrf.mxu0
    %v684 = vadd.f32 %v644, %v683
    %v685 = vpop.f32.mrf.mxu0
    %v686 = vpop.f32.mrf.mxu0
    %v687 = vpop.f32.mrf.mxu0
    %688 = vdwg.mxu0
    %689 = vmatprep.subr.bf16.mxu0 0
    %690 = vmatpush1.bf16.msra.mxu0 %v496
    %691 = vmatprep.subr.bf16.mxu0 0
    %692 = vmatpush1.bf16.msra.mxu0 %v495
    %693 = vmatprep.subr.bf16.mxu0 0
    %694 = vmatpush1.bf16.msra.mxu0 %v494
    %695 = vmatprep.subr.bf16.mxu0 0
    %696 = vmatpush1.bf16.msra.mxu0 %v493
    %697 = vmatprep.subr.bf16.mxu0 0
    %698 = vmatpush1.bf16.msra.mxu0 %v492
    %699 = vmatprep.subr.bf16.mxu0 0
    %700 = vmatpush1.bf16.msra.mxu0 %v491
    %701 = vmatprep.subr.bf16.mxu0 0
    %702 = vmatpush1.bf16.msra.mxu0 %v490
    %703 = vmatprep.subr.bf16.mxu0 0
    %704 = vmatpush1.bf16.msra.mxu0 %v489
    %705 = vmatprep.subr.bf16.mxu0 0
    %706 = vmatpush2.bf16.msra.mxu0 %v504
    %707 = vmatprep.subr.bf16.mxu0 0
    %708 = vmatpush2.bf16.msra.mxu0 %v503
    %709 = vmatprep.subr.bf16.mxu0 0
    %710 = vmatpush2.bf16.msra.mxu0 %v502
    %711 = vmatprep.subr.bf16.mxu0 0
    %712 = vmatpush2.bf16.msra.mxu0 %v501
    %713 = vmatprep.subr.bf16.mxu0 0
    %714 = vmatpush2.bf16.msra.mxu0 %v500
    %715 = vmatprep.subr.bf16.mxu0 0
    %716 = vmatpush2.bf16.msra.mxu0 %v499
    %717 = vmatprep.subr.bf16.mxu0 0
    %718 = vmatpush2.bf16.msra.mxu0 %v498
    %719 = vmatprep.subr.bf16.mxu0 0
    %720 = vmatpush2.bf16.msra.mxu0 %v497
    %721 = vmatprep.mubr.bf16.mxu0 %v49
    %722 = vmatmul.mubr.bf16.gmra.mxu0 %v48
    %v723 = vpop.f32.mrf.mxu0
    %v724 = vadd.f32 %v684, %v723
    %v725 = vpop.f32.mrf.mxu0
    %v726 = vpop.f32.mrf.mxu0
    %v727 = vpop.f32.mrf.mxu0
    %728 = vdwg.mxu0
    %v729 = vtanh.pop %v724
    %v730 = vld [vmem:[%s3] sm:$0xff]
    %v731 = vld [vmem:[%s3 + $0x8] sm:$0xff]
    %v732 = vld [vmem:[%s3 + $0x10] sm:$0xff]
    %v733 = vld [vmem:[%s4] sm:$0x1]
    %v735 = vlaneseq
    %v736 = vshrl.u32 %v735, 7
    %v737 = vsub.s32 0, %v736
    %v738 = vrot.slane %v733, %v737
    %vm740 = vcmask 195584
    %v742 = vsel %vm740, %v729, 0
    %744 = vmatprep.subr.mxu0 0.0
    %745 = vmatpush1.msra.mxu0 0.0
    %746 = vmatprep.subr.mxu0 0.0
    %747 = vmatpush1.msra.mxu0 0.0
    %748 = vmatprep.subr.mxu0 0.0
    %749 = vmatpush1.msra.mxu0 0.0
    %750 = vmatprep.subr.mxu0 0.0
    %751 = vmatpush1.msra.mxu0 0.0
    %752 = vmatprep.subr.mxu0 0.0
    %753 = vmatpush1.msra.mxu0 0.0
    %754 = vmatprep.subr.mxu0 0.0
    %755 = vmatpush1.msra.mxu0 0.0
    %756 = vmatprep.subr.mxu0 0.0
    %757 = vmatpush1.msra.mxu0 0.0
    %758 = vmatprep.subr.mxu0 0.0
    %759 = vmatpush1.msra.mxu0 0.0
    %760 = vmatprep.subr.mxu0 0.0
    %761 = vmatpush1.msra.mxu0 0.0
    %762 = vmatprep.subr.mxu0 0.0
    %763 = vmatpush1.msra.mxu0 0.0
    %764 = vmatprep.subr.mxu0 0.0
    %765 = vmatpush1.msra.mxu0 0.0
    %766 = vmatprep.subr.mxu0 0.0
    %767 = vmatpush1.msra.mxu0 0.0
    %768 = vmatprep.subr.mxu0 0.0
    %769 = vmatpush1.msra.mxu0 0.0
    %770 = vmatprep.subr.mxu0 0.0
    %771 = vmatpush1.msra.mxu0 %v732
    %772 = vmatprep.subr.mxu0 0.0
    %773 = vmatpush1.msra.mxu0 %v731
    %774 = vmatprep.subr.mxu0 0.0
    %775 = vmatpush1.msra.mxu0 %v730
    %776 = vmatprep.subr.mxu0 0.0
    %777 = vmatpush2.msra.mxu0 0.0
    %778 = vmatprep.subr.mxu0 0.0
    %779 = vmatpush2.msra.mxu0 0.0
    %780 = vmatprep.subr.mxu0 0.0
    %781 = vmatpush2.msra.mxu0 0.0
    %782 = vmatprep.subr.mxu0 0.0
    %783 = vmatpush2.msra.mxu0 0.0
    %784 = vmatprep.subr.mxu0 0.0
    %785 = vmatpush2.msra.mxu0 0.0
    %786 = vmatprep.subr.mxu0 0.0
    %787 = vmatpush2.msra.mxu0 0.0
    %788 = vmatprep.subr.mxu0 0.0
    %789 = vmatpush2.msra.mxu0 0.0
    %790 = vmatprep.subr.mxu0 0.0
    %791 = vmatpush2.msra.mxu0 0.0
    %792 = vmatprep.subr.mxu0 0.0
    %793 = vmatpush2.msra.mxu0 0.0
    %794 = vmatprep.subr.mxu0 0.0
    %795 = vmatpush2.msra.mxu0 0.0
    %796 = vmatprep.subr.mxu0 0.0
    %797 = vmatpush2.msra.mxu0 0.0
    %798 = vmatprep.subr.mxu0 0.0
    %799 = vmatpush2.msra.mxu0 0.0
    %800 = vmatprep.subr.mxu0 0.0
    %801 = vmatpush2.msra.mxu0 0.0
    %802 = vmatprep.subr.mxu0 0.0
    %803 = vmatpush2.msra.mxu0 0.0
    %804 = vmatprep.subr.mxu0 0.0
    %805 = vmatpush2.msra.mxu0 0.0
    %806 = vmatprep.subr.mxu0 0.0
    %807 = vmatpush2.msra.mxu0 0.0
    %808 = vmatprep.mubr.f32.mxu0 0.0
    %809 = vmatmul.mubr.f32.gmra.mxu0 %v742
    %v810 = vpop.f32.mrf.mxu0
    %v811 = vadd.f32 %v738, %v810
    %v812 = vpop.f32.mrf.mxu0
    %813 = vdwg.mxu0
    %v814 = vtanh.pop %v811
    %v815 = vld [vmem:[%s5] sm:$0xff]
    %v816 = vld [vmem:[%s5 + $0x8] sm:$0xf]
    %v817 = vld [vmem:[%s6] sm:$0x1]
    %v819 = vlaneseq
    %v820 = vshrl.u32 %v819, 7
    %v821 = vsub.s32 0, %v820
    %v822 = vrot.slane %v817, %v821
    %vm824 = vcmask 97280
    %v826 = vsel %vm824, %v814, 0
    %vm828 = vcmask 1043456
    %v830 = vsel %vm828, %v816, 0
    %832 = vmatprep.subr.mxu0 0.0
    %833 = vmatpush1.msra.mxu0 0.0
    %834 = vmatprep.subr.mxu0 0.0
    %835 = vmatpush1.msra.mxu0 0.0
    %836 = vmatprep.subr.mxu0 0.0
    %837 = vmatpush1.msra.mxu0 0.0
    %838 = vmatprep.subr.mxu0 0.0
    %839 = vmatpush1.msra.mxu0 0.0
    %840 = vmatprep.subr.mxu0 0.0
    %841 = vmatpush1.msra.mxu0 0.0
    %842 = vmatprep.subr.mxu0 0.0
    %843 = vmatpush1.msra.mxu0 0.0
    %844 = vmatprep.subr.mxu0 0.0
    %845 = vmatpush1.msra.mxu0 0.0
    %846 = vmatprep.subr.mxu0 0.0
    %847 = vmatpush1.msra.mxu0 0.0
    %848 = vmatprep.subr.mxu0 0.0
    %849 = vmatpush1.msra.mxu0 0.0
    %850 = vmatprep.subr.mxu0 0.0
    %851 = vmatpush1.msra.mxu0 0.0
    %852 = vmatprep.subr.mxu0 0.0
    %853 = vmatpush1.msra.mxu0 0.0
    %854 = vmatprep.subr.mxu0 0.0
    %855 = vmatpush1.msra.mxu0 0.0
    %856 = vmatprep.subr.mxu0 0.0
    %857 = vmatpush1.msra.mxu0 0.0
    %858 = vmatprep.subr.mxu0 0.0
    %859 = vmatpush1.msra.mxu0 0.0
    %860 = vmatprep.subr.mxu0 0.0
    %861 = vmatpush1.msra.mxu0 %v830
    %862 = vmatprep.subr.mxu0 0.0
    %863 = vmatpush1.msra.mxu0 %v815
    %864 = vmatprep.subr.mxu0 0.0
    %865 = vmatpush2.msra.mxu0 0.0
    %866 = vmatprep.subr.mxu0 0.0
    %867 = vmatpush2.msra.mxu0 0.0
    %868 = vmatprep.subr.mxu0 0.0
    %869 = vmatpush2.msra.mxu0 0.0
    %870 = vmatprep.subr.mxu0 0.0
    %871 = vmatpush2.msra.mxu0 0.0
    %872 = vmatprep.subr.mxu0 0.0
    %873 = vmatpush2.msra.mxu0 0.0
    %874 = vmatprep.subr.mxu0 0.0
    %875 = vmatpush2.msra.mxu0 0.0
    %876 = vmatprep.subr.mxu0 0.0
    %877 = vmatpush2.msra.mxu0 0.0
    %878 = vmatprep.subr.mxu0 0.0
    %879 = vmatpush2.msra.mxu0 0.0
    %880 = vmatprep.subr.mxu0 0.0
    %881 = vmatpush2.msra.mxu0 0.0
    %882 = vmatprep.subr.mxu0 0.0
    %883 = vmatpush2.msra.mxu0 0.0
    %884 = vmatprep.subr.mxu0 0.0
    %885 = vmatpush2.msra.mxu0 0.0
    %886 = vmatprep.subr.mxu0 0.0
    %887 = vmatpush2.msra.mxu0 0.0
    %888 = vmatprep.subr.mxu0 0.0
    %889 = vmatpush2.msra.mxu0 0.0
    %890 = vmatprep.subr.mxu0 0.0
    %891 = vmatpush2.msra.mxu0 0.0
    %892 = vmatprep.subr.mxu0 0.0
    %893 = vmatpush2.msra.mxu0 0.0
    %894 = vmatprep.subr.mxu0 0.0
    %895 = vmatpush2.msra.mxu0 0.0
    %896 = vmatprep.mubr.f32.mxu0 0.0
    %897 = vmatmul.mubr.f32.gmra.mxu0 %v826
    %v898 = vpop.f32.mrf.mxu0
    %v899 = vadd.f32 %v822, %v898
    %v900 = vpop.f32.mrf.mxu0
    %901 = vdwg.mxu0
    %v902 = vtanh.pop %v899
    %v903 = vld [vmem:[%s7] sm:$0x7f]
    %v904 = vld [vmem:[%s8] sm:$0x1]
    %v906 = vlaneseq
    %v907 = vshrl.u32 %v906, 7
    %v908 = vsub.s32 0, %v907
    %v909 = vrot.slane %v904, %v908
    %vm911 = vcmask 56320
    %v913 = vsel %vm911, %v902, 0
    %vm915 = vcmask 1046528
    %v917 = vsel %vm915, %v903, 0
    %919 = vmatprep.subr.mxu0 0.0
    %920 = vmatpush1.msra.mxu0 0.0
    %921 = vmatprep.subr.mxu0 0.0
    %922 = vmatpush1.msra.mxu0 0.0
    %923 = vmatprep.subr.mxu0 0.0
    %924 = vmatpush1.msra.mxu0 0.0
    %925 = vmatprep.subr.mxu0 0.0
    %926 = vmatpush1.msra.mxu0 0.0
    %927 = vmatprep.subr.mxu0 0.0
    %928 = vmatpush1.msra.mxu0 0.0
    %929 = vmatprep.subr.mxu0 0.0
    %930 = vmatpush1.msra.mxu0 0.0
    %931 = vmatprep.subr.mxu0 0.0
    %932 = vmatpush1.msra.mxu0 0.0
    %933 = vmatprep.subr.mxu0 0.0
    %934 = vmatpush1.msra.mxu0 0.0
    %935 = vmatprep.subr.mxu0 0.0
    %936 = vmatpush1.msra.mxu0 0.0
    %937 = vmatprep.subr.mxu0 0.0
    %938 = vmatpush1.msra.mxu0 0.0
    %939 = vmatprep.subr.mxu0 0.0
    %940 = vmatpush1.msra.mxu0 0.0
    %941 = vmatprep.subr.mxu0 0.0
    %942 = vmatpush1.msra.mxu0 0.0
    %943 = vmatprep.subr.mxu0 0.0
    %944 = vmatpush1.msra.mxu0 0.0
    %945 = vmatprep.subr.mxu0 0.0
    %946 = vmatpush1.msra.mxu0 0.0
    %947 = vmatprep.subr.mxu0 0.0
    %948 = vmatpush1.msra.mxu0 0.0
    %949 = vmatprep.subr.mxu0 0.0
    %950 = vmatpush1.msra.mxu0 %v917
    %951 = vmatprep.subr.mxu0 0.0
    %952 = vmatpush2.msra.mxu0 0.0
    %953 = vmatprep.subr.mxu0 0.0
    %954 = vmatpush2.msra.mxu0 0.0
    %955 = vmatprep.subr.mxu0 0.0
    %956 = vmatpush2.msra.mxu0 0.0
    %957 = vmatprep.subr.mxu0 0.0
    %958 = vmatpush2.msra.mxu0 0.0
    %959 = vmatprep.subr.mxu0 0.0
    %960 = vmatpush2.msra.mxu0 0.0
    %961 = vmatprep.subr.mxu0 0.0
    %962 = vmatpush2.msra.mxu0 0.0
    %963 = vmatprep.subr.mxu0 0.0
    %964 = vmatpush2.msra.mxu0 0.0
    %965 = vmatprep.subr.mxu0 0.0
    %966 = vmatpush2.msra.mxu0 0.0
    %967 = vmatprep.subr.mxu0 0.0
    %968 = vmatpush2.msra.mxu0 0.0
    %969 = vmatprep.subr.mxu0 0.0
    %970 = vmatpush2.msra.mxu0 0.0
    %971 = vmatprep.subr.mxu0 0.0
    %972 = vmatpush2.msra.mxu0 0.0
    %973 = vmatprep.subr.mxu0 0.0
    %974 = vmatpush2.msra.mxu0 0.0
    %975 = vmatprep.subr.mxu0 0.0
    %976 = vmatpush2.msra.mxu0 0.0
    %977 = vmatprep.subr.mxu0 0.0
    %978 = vmatpush2.msra.mxu0 0.0
    %979 = vmatprep.subr.mxu0 0.0
    %980 = vmatpush2.msra.mxu0 0.0
    %981 = vmatprep.subr.mxu0 0.0
    %982 = vmatpush2.msra.mxu0 0.0
    %983 = vmatprep.mubr.f32.mxu0 0.0
    %984 = vmatmul.mubr.f32.gmra.mxu0 %v913
    %v985 = vpop.f32.mrf.mxu0
    %v986 = vadd.f32 %v909, %v985
    %v987 = vpop.f32.mrf.mxu0
    %988 = vdwg.mxu0
    %v989 = vpack.c.bf16 %v986, %v986
    %990 = vst [vmem:[#allocation2] sm:$0xf] %v989
    // Predicated region
    $region38: #{tpu_custom_call.1} parent=1 // pred_check
      _
    $region39: #{tpu_custom_call.1} parent=1 // pred_check_branch
      %992 = sbr.rel (0) target = $region41
    $region40: #{tpu_custom_call.1} parent=1 // pred_region
      %s994 = ssub.s32 64, 64
      %995 = vsyncadd [#allocation3], %s994
      %s997 = sshll.u32 [#allocation2], 4
      %s998 = int_to_ptr.vmem [resolvable:$true] %s997
      %1000 = dma.vmem_to_hbm [thread:$0]  %s998, 64, %s9, [#allocation3]
    $region41: #{tpu_custom_call.1} parent=1 // pred_fallthru
      _
    // Predicated region
    $region42: #{tpu_custom_call.1} parent=1 // pred_check
      _
    $region43: #{tpu_custom_call.1} parent=1 // pred_check_branch
      %1002 = sbr.rel (0) target = $region45
    $region44: #{tpu_custom_call.1} parent=1 // pred_region
      %1003 = dma.done [#allocation3], 64
    $region45: #{tpu_custom_call.1} parent=1 // pred_fallthru
      _
    %1004 = vsyncpa [#allocation3], 1

</llo_original>
